<compile_context>
chip_gen: v6e
topology: v6e:2x2x1
jax: 0.10.0
libtpu: 0.0.40
codegen_flags: <defaults>
</compile_context>

<pallas_src>
import jax
import jax.numpy as jnp
from jax.experimental import pallas as pl
from jax.experimental.pallas import tpu as pltpu

# Below this raw-data size a single block is cheapest (per-step overhead
# dominates); above it we always split into >=4 blocks for pipelining /
# megacore sharding.
_SINGLE_BLOCK_MAX_BYTES = 512 << 10
# Largest unaligned total we handle as one (1, total) block without padding.
_UNALIGNED_SINGLE_BLOCK_MAX_BYTES = 512 << 10


def _swish_kernel(x_ref, o_ref):
    # Compute in f32 (no-op for f32 inputs; upcasts bf16 for accuracy).
    x = x_ref[...].astype(jnp.float32)
    # sigmoid via one EUP transcendental: sigmoid(x) = 0.5 * tanh(x/2) + 0.5
    s = 0.5 * jnp.tanh(0.5 * x) + 0.5
    o_ref[...] = (x * s).astype(o_ref.dtype)


def _round_up(v: int, m: int) -> int:
    return -(-v // m) * m


def _tpu_block_budget():
    """Pick (block_bytes, vmem_limit_bytes) per TPU generation.

    Conservative default (4 MiB blocks, 40 MiB scoped VMEM) is safe on v7x
    (64 MiB VMEM per TC: in+out double-buffered = 16 MiB).  On 128-MiB-VMEM
    chips (v5e/v6e) we grow to 8 MiB blocks with the limit raised to 64 MiB.
    """
    block_bytes = 4 << 20
    vmem_limit = 40 << 20
    try:
        vmem = pltpu.get_tpu_info().vmem_capacity_bytes
        if vmem is not None and vmem >= (100 << 20):
            block_bytes = 8 << 20
            vmem_limit = 64 << 20
    except Exception:
        pass  # unknown hardware -> keep the conservative settings
    return block_bytes, vmem_limit


def swish_pallas(x: jax.Array, *, block_bytes: int | None = None,
                 vmem_limit_bytes: int | None = None) -> jax.Array:
    """Swish(x) = x * sigmoid(x), elementwise, exact shape/dtype semantics."""
    orig_shape = x.shape
    orig_dtype = x.dtype
    total = x.size
    if total == 0:
        return x
    itemsize = x.dtype.itemsize

    if block_bytes is None or vmem_limit_bytes is None:
        bb, vl = _tpu_block_budget()
        block_bytes = block_bytes or bb
        vmem_limit_bytes = vmem_limit_bytes or vl

    x_flat = x.reshape(-1)  # metadata-only reshape, no copy

    # ---- choose a zero-copy 2-D view --------------------------------------
    lanes = None
    for cand in (1024, 512, 256, 128):  # widest lane-dense view that divides
        if total % cand == 0:
            lanes = cand
            break

    padded_total = total
    if lanes is not None:
        rows = total // lanes
    elif total * itemsize <= _UNALIGNED_SINGLE_BLOCK_MAX_BYTES:
        # Small, not lane-aligned: run the whole array as one (1, total)
        # block (block == full array dims is always legal); the sub-128 tail
        # is handled by masked stores. No copies, no padding.
        lanes, rows = total, 1
    else:
        # TODO(synk): rare large-and-unaligned case still pads (one extra HBM
        # round trip); a ragged tiled path could remove it.
        pad = (-total) % 128
        x_flat = jnp.concatenate([x_flat, jnp.zeros((pad,), dtype=orig_dtype)])
        lanes = 128
        padded_total = total + pad
        rows = padded_total // lanes

    x2d = x_flat.reshape(rows, lanes)

    # ---- row tiling --------------------------------------------------------
    data_bytes = rows * lanes * itemsize
    if data_bytes <= _SINGLE_BLOCK_MAX_BYTES:
        tr = rows  # single block == full array dims (always legal)
    else:
        # Budget-limited tile, but also force >=4 blocks so DMA pipelining has
        # work to overlap and both v7x TensorCores get grid steps.
        tr_budget = max(32, (block_bytes // (lanes * itemsize)) // 32 * 32)
        tr_quarter = _round_up(pl.cdiv(rows, 4), 32)
        tr = max(32, min(tr_budget, tr_quarter, rows))

    grid = (pl.cdiv(rows, tr),)

    cost = pl.CostEstimate(
        flops=5 * padded_total,
        transcendentals=padded_total,
        bytes_accessed=2 * padded_total * itemsize,
    )

    out2d = pl.pallas_call(
        _swish_kernel,
        out_shape=jax.ShapeDtypeStruct((rows, lanes), orig_dtype),
        grid_spec=pltpu.PrefetchScalarGridSpec(
            num_scalar_prefetch=0,
            grid=grid,
            in_specs=[pl.BlockSpec((tr, lanes), lambda i: (i, 0))],
            out_specs=pl.BlockSpec((tr, lanes), lambda i: (i, 0)),
        ),
        compiler_params=pltpu.CompilerParams(
            dimension_semantics=("parallel",),
            vmem_limit_bytes=vmem_limit_bytes,
        ),
        cost_estimate=cost,
    )(x2d)

    out_flat = out2d.reshape(-1)
    if padded_total != total:
        out_flat = out_flat[:total]
    return out_flat.reshape(orig_shape)


def _check(x, atol=1e-5, rtol=1e-5):
    out = jax.block_until_ready(swish_pallas(x))
    ref = x * jax.nn.sigmoid(x)
    assert out.shape == x.shape and out.dtype == x.dtype
    assert jnp.allclose(out, ref, atol=atol, rtol=rtol), (
        float(jnp.max(jnp.abs(out - ref)))
    )


if __name__ == "__main__":
    key = jax.random.PRNGKey(0)

    # primary case: NCHW input, batch=2, channels=4, spatial=16x16
    # (lane-aligned -> zero-copy single-block path)
    x = jax.random.normal(key, (2, 4, 16, 16), dtype=jnp.float32)
    _check(x)

    # awkward total (3*5*7*11 = 1155, not a multiple of 128)
    # -> zero-copy (1, total) single-block path, no padding
    k1, k2 = jax.random.split(key)
    x_odd = jax.random.normal(k1, (3, 5, 7, 11), dtype=jnp.float32)
    _check(x_odd)

    # medium case -> lane-dense (rows, 1024) view, multi-block grid with a
    # ragged (masked) last block
    x_med = jax.random.normal(k2, (4, 4, 257, 128), dtype=jnp.float32)
    _check(x_med)

    print("KERNEL_OK")
</pallas_src>

<mosaic_0001>
module attributes {stable_mosaic.version = 11 : i64} {
  func.func @_swish_kernel(%arg0: i32, %arg1: memref<2x1024xf32, #tpu.memory_space<vmem>>, %arg2: memref<2x1024xf32, #tpu.memory_space<vmem>>) attributes {dimension_semantics = [#tpu.dimension_semantics<parallel>], iteration_bounds = array<i64: 1>, scalar_prefetch = 0 : i64, scratch_operands = 0 : i64, tpu.core_type = #tpu.core_type<tc>, window_params = [{transform_indices = @transform_0, window_bounds = array<i64: 2, 1024>}, {transform_indices = @transform_1, window_bounds = array<i64: 2, 1024>}]} {
    %c0 = arith.constant 0 : index
    %c0_0 = arith.constant 0 : index
    %0 = vector.load %arg1[%c0, %c0_0] : memref<2x1024xf32, #tpu.memory_space<vmem>>, vector<2x1024xf32>
    %cst = arith.constant 5.000000e-01 : f32
    %1 = vector.broadcast %cst : f32 to vector<2x1024xf32>
    %2 = arith.mulf %1, %0 : vector<2x1024xf32>
    %3 = math.tanh %2 : vector<2x1024xf32>
    %cst_1 = arith.constant 5.000000e-01 : f32
    %4 = vector.broadcast %cst_1 : f32 to vector<2x1024xf32>
    %5 = arith.mulf %4, %3 : vector<2x1024xf32>
    %cst_2 = arith.constant 5.000000e-01 : f32
    %6 = vector.broadcast %cst_2 : f32 to vector<2x1024xf32>
    %7 = arith.addf %5, %6 : vector<2x1024xf32>
    %8 = arith.mulf %0, %7 : vector<2x1024xf32>
    %c0_3 = arith.constant 0 : index
    %c0_4 = arith.constant 0 : index
    %9 = vector.load %arg2[%c0_3, %c0_4] : memref<2x1024xf32, #tpu.memory_space<vmem>>, vector<2x1024xf32>
    tpu.vector_store %arg2[%c0_3, %c0_4], %8 {strides = array<i32>} : memref<2x1024xf32, #tpu.memory_space<vmem>>, vector<2x1024xf32>,
    return
  }
  func.func @transform_0(%arg0: i32) -> (i32, i32) {
    %c0_i32 = arith.constant 0 : i32
    %c0_i32_0 = arith.constant 0 : i32
    return %arg0, %c0_i32 : i32, i32
  }
  func.func @transform_1(%arg0: i32) -> (i32, i32) {
    %c0_i32 = arith.constant 0 : i32
    %c0_i32_0 = arith.constant 0 : i32
    return %arg0, %c0_i32 : i32, i32
  }
}

</mosaic_0001>

<llo_original>
// kernel: tpu_custom_call.1
$region0: #{tpu_custom_call.1}
  #allocation0 [shape = 'u32[]', space=smem, size = 0x4, offset = 0x4, fixed_abs, tag = 'smem constant byte address 0x4 - core index']
  #allocation1 [shape = 'u32[144,128]{1,0:T(1,128)}', space=vmem, size = 0x12000, scoped, tag = 'internal scratch']
  %s0 = inlined_call_operand.hbm [shape: f32[2,1024], index: 0, kind: input, shape index: {}]
  %s1 = inlined_call_operand.hbm [shape: f32[2,1024], index: 1, kind: output, shape index: {}]
  %s2 = sld [smem:[#allocation0]]
  $region18: #{tpu_custom_call.1} parent=0
    _
  %s4 = ssub.s32 1, %s2
  %s5 = scalar_select 0, %s4, %s2
  $region1: #{tpu_custom_call.1} parent=0
    #allocation2 [shape = 'u8[8192]{0}', space=vmem, size = 0x2000, scoped, tag = 'input window, operand 0, single buffered']
    #allocation3 [shape = 's32[1]{0}', space=sflag, size = 0x4, scoped, tag = 'scoped memory for tpu_custom_call.1']
    #allocation4 [shape = 's32[1]{0}', space=sflag, size = 0x4, scoped, tag = 'scoped memory for tpu_custom_call.1']
    #allocation5 [shape = 'u8[8192]{0}', space=vmem, size = 0x2000, scoped, tag = 'output window, operand 0, single buffered']
    %6 = vsyncpa [#allocation3], 0
    %7 = vsyncpa [#allocation4], 0
    // Predicated region
    $region2: #{tpu_custom_call.1} parent=1 // pred_check
      _
    $region3: #{tpu_custom_call.1} parent=1 // pred_check_branch
      %9 = sbr.rel (0) target = $region5
    $region4: #{tpu_custom_call.1} parent=1 // pred_region
      %s11 = ssub.s32 256, 256
      %12 = vsyncadd [#allocation3], %s11
      %s14 = sshll.u32 [#allocation2], 4
      %s15 = int_to_ptr.vmem [resolvable:$true] %s14
      %17 = dma.hbm_to_vmem [thread:$0]  %s0, 256, %s15, [#allocation3]
    $region5: #{tpu_custom_call.1} parent=1 // pred_fallthru
      _
    // Predicated region
    $region6: #{tpu_custom_call.1} parent=1 // pred_check
      _
    $region7: #{tpu_custom_call.1} parent=1 // pred_check_branch
      %19 = sbr.rel (0) target = $region9
    $region8: #{tpu_custom_call.1} parent=1 // pred_region
      %20 = dma.done [#allocation3], 256
    $region9: #{tpu_custom_call.1} parent=1 // pred_fallthru
      _
    %v21 = vld [vmem:[#allocation2] sm:$0xff]
    %v22 = vld [vmem:[#allocation2 + $0x8] sm:$0xff]
    %v23 = vmul.f32 %v21, 0.5
    %v24 = vmul.f32 %v22, 0.5
    %v25 = vtanh.pop %v23
    %v26 = vtanh.pop %v24
    %v27 = vmul.f32 %v25, 0.5
    %v28 = vmul.f32 %v26, 0.5
    %v29 = vadd.f32 %v27, 0.5
    %v30 = vadd.f32 %v28, 0.5
    %v31 = vmul.f32 %v21, %v29
    %v32 = vmul.f32 %v22, %v30
    %33 = vst [vmem:[#allocation5] sm:$0xff] %v31
    %34 = vst [vmem:[#allocation5 + $0x8] sm:$0xff] %v32
    // Predicated region
    $region10: #{tpu_custom_call.1} parent=1 // pred_check
      _
    $region11: #{tpu_custom_call.1} parent=1 // pred_check_branch
      %36 = sbr.rel (0) target = $region13
    $region12: #{tpu_custom_call.1} parent=1 // pred_region
      %s38 = ssub.s32 256, 256
      %39 = vsyncadd [#allocation4], %s38
      %s41 = sshll.u32 [#allocation5], 4
      %s42 = int_to_ptr.vmem [resolvable:$true] %s41
      %44 = dma.vmem_to_hbm [thread:$0]  %s42, 256, %s1, [#allocation4]
    $region13: #{tpu_custom_call.1} parent=1 // pred_fallthru
      _
    // Predicated region
    $region14: #{tpu_custom_call.1} parent=1 // pred_check
      _
    $region15: #{tpu_custom_call.1} parent=1 // pred_check_branch
      %46 = sbr.rel (0) target = $region17
    $region16: #{tpu_custom_call.1} parent=1 // pred_region
      %47 = dma.done [#allocation4], 256
    $region17: #{tpu_custom_call.1} parent=1 // pred_fallthru
      _
    %48 = vsyncpa [#allocation3], 1
    %49 = vsyncpa [#allocation4], 1

</llo_original>
